<compile_context>
chip_gen: v5e
topology: v5e:2x2
jax: 0.10.0
libtpu: 0.0.40
codegen_flags: <defaults>
</compile_context>

<pallas_src>
import jax
import jax.numpy as jnp
from jax import lax
from jax.experimental import pallas as pl
from jax.experimental.pallas import tpu as pltpu

B, S, D, V = 8, 16, 128, 64       # batch, seq, hidden, vocab (small synthetic sizes)
V2 = 2 * V                        # stacked code+doc vocab (= 128, full MXU contraction)
NPAD = 128                        # lane-dense width for the packed logits/stats output
LN_EPS = 1e-5                     # torch.nn.LayerNorm default eps


def _first_argmax(x, axis_size):
    """First index of the max along axis 1 (torch.argmax tie-break) -> (rows, 1)."""
    mx = jnp.max(x, axis=1, keepdims=True)
    iota = lax.broadcasted_iota(jnp.int32, x.shape, 1)
    cand = jnp.where(x == mx, iota, axis_size)
    return jnp.min(cand, axis=1, keepdims=True)


def _layernorm(x, g, b):
    mu = jnp.mean(x, axis=-1, keepdims=True)
    var = jnp.mean((x - mu) * (x - mu), axis=-1, keepdims=True)
    return (x - mu) * lax.rsqrt(var + LN_EPS) * g + b


def _l2_normalize(x):
    # torch: x / x.norm(dim=1, keepdim=True); rsqrt goes to the (idle) EUP slot.
    return x * lax.rsqrt(jnp.sum(x * x, axis=-1, keepdims=True))


def _codesearch_kernel(code_ids_ref, doc_ids_ref, table_ref,
                       ln_cg_ref, ln_cb_ref, ln_dg_ref, ln_db_ref,
                       scale_ref, out_ref):
    code_ids = code_ids_ref[...]                                   # (B, S) int32
    doc_ids = doc_ids_ref[...]                                     # (B, S) int32

    # ---- encoder stand-in: fused one-hot embedding lookup on the MXU ---------
    # Stack code/doc lookups: doc ids are offset by V into the stacked table so a
    # single (2B*S, 2V) @ (2V, D) matmul does both lookups with K = 128.
    ids_all = jnp.concatenate([code_ids, doc_ids + V], axis=0)     # (2B, S)
    v_iota = lax.broadcasted_iota(jnp.int32, (2 * B, S, V2), 2)
    onehot = (ids_all[:, :, None] == v_iota).astype(jnp.float32)   # (2B, S, 2V)
    h_all = jnp.dot(onehot.reshape(2 * B * S, V2), table_ref[...],
                    preferred_element_type=jnp.float32)            # (2B*S, D)

    # ---- pooled token: hidden[b, ids[b].argmax()] as one MXU gather ----------
    idx_all = _first_argmax(ids_all, S)                            # (2B, 1)
    target = lax.broadcasted_iota(jnp.int32, (2 * B, 1), 0) * S + idx_all
    col2 = lax.broadcasted_iota(jnp.int32, (2 * B, 2 * B * S), 1)
    pool_oh = (col2 == target).astype(jnp.float32)                 # (2B, 2B*S)
    emb_all = jnp.dot(pool_oh, h_all, preferred_element_type=jnp.float32)  # (2B, D)
    code_emb = emb_all[:B]                                         # (B, D)
    doc_emb = emb_all[B:]                                          # (B, D)

    # ---- LayerNorm + L2 normalize --------------------------------------------
    code_f = _l2_normalize(_layernorm(code_emb, ln_cg_ref[...], ln_cb_ref[...]))
    doc_f = _l2_normalize(_layernorm(doc_emb, ln_dg_ref[...], ln_db_ref[...]))

    # ---- similarity logits (lane-dense, padded to 128 columns) ---------------
    scale = jnp.exp(jnp.full((1, 1), scale_ref[0], jnp.float32))   # EUP exp, 1 vreg
    zpad = jnp.zeros((NPAD - B, D), jnp.float32)
    doc_f_pad = jnp.concatenate([doc_f, zpad], axis=0)             # (128, D)
    code_f_pad = jnp.concatenate([code_f, zpad], axis=0)           # (128, D)
    lg_code = scale * lax.dot_general(                             # logits_per_code
        code_f, doc_f_pad, (((1,), (1,)), ((), ())),
        preferred_element_type=jnp.float32)                        # (B, 128)
    lg_doc = scale * lax.dot_general(                              # logits_per_doc
        doc_f, code_f_pad, (((1,), (1,)), ((), ())),
        preferred_element_type=jnp.float32)                        # (B, 128)

    # ---- bidirectional cross-entropy with targets = arange(B) ----------------
    row = lax.broadcasted_iota(jnp.int32, (B, NPAD), 0)
    colp = lax.broadcasted_iota(jnp.int32, (B, NPAD), 1)
    valid = colp < B

    def _ce(lg):
        m = jnp.max(jnp.where(valid, lg, -jnp.inf), axis=1, keepdims=True)
        z = jnp.sum(jnp.where(valid, jnp.exp(lg - m), 0.0), axis=1, keepdims=True)
        lse = m + jnp.log(z)
        diag = jnp.sum(jnp.where(colp == row, lg, 0.0), axis=1, keepdims=True)
        return jnp.mean(lse - diag)

    loss = _ce(lg_code) + _ce(lg_doc)        # matches PyTorch: loss = CE_row + CE_col

    # ---- accuracy = mean(argmax(logits_per_code, 1) == arange(B)) ------------
    lg_m = jnp.where(valid, lg_code, -jnp.inf)
    mx = jnp.max(lg_m, axis=1, keepdims=True)
    pred = jnp.min(jnp.where(lg_m == mx, colp, NPAD), axis=1, keepdims=True)  # (B,1)
    targets = lax.broadcasted_iota(jnp.int32, (B, 1), 0)
    acc = jnp.mean((pred == targets).astype(jnp.float32))

    # ---- pack everything into one lane-dense (B, 128) output slab ------------
    out = lg_code                                                  # pad cols are 0
    out = jnp.where((row == 0) & (colp == B), loss, out)
    out = jnp.where((row == 0) & (colp == B + 1), acc, out)
    out_ref[...] = out


def code_search_forward(code_ids, code_mask, doc_ids, doc_mask, params):
    # TODO(synk): attention masks would feed the transformer attention; unused here.
    del code_mask, doc_mask
    table = jnp.concatenate([params["code_embed"], params["doc_embed"]], axis=0)

    vmem = pl.BlockSpec(memory_space=pltpu.MemorySpace.VMEM)
    smem = pl.BlockSpec(memory_space=pltpu.MemorySpace.SMEM)
    out = pl.pallas_call(
        _codesearch_kernel,
        out_shape=jax.ShapeDtypeStruct((B, NPAD), jnp.float32),
        in_specs=[vmem, vmem, vmem, vmem, vmem, vmem, vmem, smem],
        out_specs=vmem,
    )(code_ids.astype(jnp.int32), doc_ids.astype(jnp.int32), table,
      params["ln_code_g"], params["ln_code_b"],
      params["ln_doc_g"], params["ln_doc_b"],
      params["logit_scale"])

    return {
        "loss": out[0, B],
        "accuracy": out[0, B + 1],
        "logits_per_code": out[:, :B],
    }


def init_params(key):
    k1, k2 = jax.random.split(key, 2)
    return {
        # encoder stand-ins (deterministic synthetic weights)
        "code_embed": jax.random.normal(k1, (V, D), jnp.float32) * 0.02,
        "doc_embed": jax.random.normal(k2, (V, D), jnp.float32) * 0.02,
        # torch.nn.LayerNorm default init: weight=1, bias=0
        "ln_code_g": jnp.ones((1, D), jnp.float32),
        "ln_code_b": jnp.zeros((1, D), jnp.float32),
        "ln_doc_g": jnp.ones((1, D), jnp.float32),
        "ln_doc_b": jnp.zeros((1, D), jnp.float32),
        # logit_scale = log(1 / 0.07), stored as an SMEM scalar
        "logit_scale": jnp.full((1,), jnp.log(1.0 / 0.07), jnp.float32),
    }


def _reference(code_ids, doc_ids, params):
    """Pure-JAX reference of the fused forward (same encoder stand-in)."""
    code_h = params["code_embed"][code_ids]                        # (B, S, D)
    doc_h = params["doc_embed"][doc_ids]
    c_idx = jnp.argmax(code_ids, axis=1)
    d_idx = jnp.argmax(doc_ids, axis=1)
    code_emb = code_h[jnp.arange(B), c_idx]
    doc_emb = doc_h[jnp.arange(B), d_idx]

    def ln(x, g, b):
        mu = x.mean(-1, keepdims=True)
        var = ((x - mu) ** 2).mean(-1, keepdims=True)
        return (x - mu) / jnp.sqrt(var + LN_EPS) * g + b

    cf = ln(code_emb, params["ln_code_g"], params["ln_code_b"])
    df = ln(doc_emb, params["ln_doc_g"], params["ln_doc_b"])
    cf = cf / jnp.linalg.norm(cf, axis=1, keepdims=True)
    df = df / jnp.linalg.norm(df, axis=1, keepdims=True)
    logits = jnp.exp(params["logit_scale"][0]) * cf @ df.T
    tgt = jnp.arange(B)

    def ce(lg):
        return jnp.mean(jax.nn.logsumexp(lg, axis=1) - lg[jnp.arange(B), tgt])

    loss = ce(logits) + ce(logits.T)
    acc = jnp.mean((jnp.argmax(logits, axis=1) == tgt).astype(jnp.float32))
    return loss, acc, logits


if __name__ == "__main__":
    key = jax.random.PRNGKey(0)
    kp, kc, kd = jax.random.split(key, 3)
    params = init_params(kp)

    code_ids = jax.random.randint(kc, (B, S), 0, V, dtype=jnp.int32)
    doc_ids = jax.random.randint(kd, (B, S), 0, V, dtype=jnp.int32)
    code_mask = jnp.ones((B, S), jnp.int32)
    doc_mask = jnp.ones((B, S), jnp.int32)

    fwd = jax.jit(code_search_forward)
    out = fwd(code_ids, code_mask, doc_ids, doc_mask, params)
    jax.block_until_ready(out)

    ref_loss, ref_acc, ref_logits = _reference(code_ids, doc_ids, params)
    assert jnp.isfinite(out["loss"]), "non-finite loss"
    assert jnp.allclose(out["loss"], ref_loss, atol=5e-2), (out["loss"], ref_loss)
    assert jnp.allclose(out["logits_per_code"], ref_logits, atol=5e-2)
    assert 0.0 <= float(out["accuracy"]) <= 1.0
    print("KERNEL_OK")
</pallas_src>

<mosaic_0001>
module attributes {stable_mosaic.version = 11 : i64} {
  func.func @_codesearch_kernel(%arg0: memref<8x16xi32, #tpu.memory_space<vmem>>, %arg1: memref<8x16xi32, #tpu.memory_space<vmem>>, %arg2: memref<128x128xf32, #tpu.memory_space<vmem>>, %arg3: memref<1x128xf32, #tpu.memory_space<vmem>>, %arg4: memref<1x128xf32, #tpu.memory_space<vmem>>, %arg5: memref<1x128xf32, #tpu.memory_space<vmem>>, %arg6: memref<1x128xf32, #tpu.memory_space<vmem>>, %arg7: memref<1xf32, #tpu.memory_space<smem>>, %arg8: memref<8x128xf32, #tpu.memory_space<vmem>>) attributes {dimension_semantics = [], scalar_prefetch = 0 : i64, scratch_operands = 0 : i64, tpu.core_type = #tpu.core_type<tc>} {
    %c0 = arith.constant 0 : index
    %c0_0 = arith.constant 0 : index
    %0 = vector.load %arg0[%c0, %c0_0] : memref<8x16xi32, #tpu.memory_space<vmem>>, vector<8x16xi32>
    %c0_1 = arith.constant 0 : index
    %c0_2 = arith.constant 0 : index
    %1 = vector.load %arg1[%c0_1, %c0_2] : memref<8x16xi32, #tpu.memory_space<vmem>>, vector<8x16xi32>
    %c64_i32 = arith.constant 64 : i32
    %2 = vector.broadcast %c64_i32 : i32 to vector<8x16xi32>
    %3 = arith.addi %1, %2 : vector<8x16xi32>
    %4 = tpu.concatenate %0, %3 in 0 : vector<8x16xi32>, vector<8x16xi32> -> vector<16x16xi32>
    %5 = tpu.iota {dimensions = array<i32: 2>} : vector<16x16x128xi32>
    %6 = vector.shape_cast %4 : vector<16x16xi32> to vector<16x16x1xi32>
    %7 = vector.broadcast %6 : vector<16x16x1xi32> to vector<16x16x128xi32>
    %8 = arith.cmpi eq, %7, %5 : vector<16x16x128xi32>
    %9 = arith.extui %8 : vector<16x16x128xi1> to vector<16x16x128xi32>
    %10 = arith.sitofp %9 : vector<16x16x128xi32> to vector<16x16x128xf32>
    %11 = vector.shape_cast %10 : vector<16x16x128xf32> to vector<256x128xf32>
    %c0_3 = arith.constant 0 : index
    %c0_4 = arith.constant 0 : index
    %12 = vector.load %arg2[%c0_3, %c0_4] : memref<128x128xf32, #tpu.memory_space<vmem>>, vector<128x128xf32>
    %cst = arith.constant dense<0.000000e+00> : vector<256x128xf32>
    %13 = tpu.matmul %11, %12, %cst {dimension_numbers = #tpu.dot_dimension_numbers<[1], [0], [0], [1], [0, 0, 1, 1], [], []>} : vector<256x128xf32>, vector<128x128xf32>, vector<256x128xf32> -> vector<256x128xf32>
    %cst_5 = arith.constant dense<-2147483648> : vector<16xi32>
    %14 = vector.multi_reduction <maxsi>, %4, %cst_5 [1] : vector<16x16xi32> to vector<16xi32>
    %15 = vector.shape_cast %14 : vector<16xi32> to vector<16x1xi32>
    %16 = tpu.iota {dimensions = array<i32: 1>} : vector<16x16xi32>
    %17 = vector.broadcast %15 : vector<16x1xi32> to vector<16x16xi32>
    %18 = arith.cmpi eq, %4, %17 : vector<16x16xi32>
    %c16_i32 = arith.constant 16 : i32
    %19 = vector.broadcast %c16_i32 : i32 to vector<16x16xi32>
    %20 = arith.select %18, %16, %19 : vector<16x16xi1>, vector<16x16xi32>
    %cst_6 = arith.constant dense<2147483647> : vector<16xi32>
    %21 = vector.multi_reduction <minsi>, %20, %cst_6 [1] : vector<16x16xi32> to vector<16xi32>
    %22 = vector.shape_cast %21 : vector<16xi32> to vector<16x1xi32>
    %23 = tpu.iota {dimensions = array<i32: 0>} : vector<16x1xi32>
    %c16_i32_7 = arith.constant 16 : i32
    %24 = vector.broadcast %c16_i32_7 : i32 to vector<16x1xi32>
    %25 = arith.muli %23, %24 : vector<16x1xi32>
    %26 = arith.addi %25, %22 : vector<16x1xi32>
    %27 = tpu.iota {dimensions = array<i32: 1>} : vector<16x256xi32>
    %28 = vector.broadcast %26 : vector<16x1xi32> to vector<16x256xi32>
    %29 = arith.cmpi eq, %27, %28 : vector<16x256xi32>
    %30 = arith.extui %29 : vector<16x256xi1> to vector<16x256xi32>
    %31 = arith.sitofp %30 : vector<16x256xi32> to vector<16x256xf32>
    %cst_8 = arith.constant dense<0.000000e+00> : vector<16x128xf32>
    %32 = tpu.matmul %31, %13, %cst_8 {dimension_numbers = #tpu.dot_dimension_numbers<[1], [0], [0], [1], [0, 0, 1, 1], [], []>} : vector<16x256xf32>, vector<256x128xf32>, vector<16x128xf32> -> vector<16x128xf32>
    %33 = vector.extract_strided_slice %32 {offsets = [0, 0], sizes = [8, 128], strides = [1, 1]} : vector<16x128xf32> to vector<8x128xf32>
    %34 = vector.extract_strided_slice %32 {offsets = [8, 0], sizes = [8, 128], strides = [1, 1]} : vector<16x128xf32> to vector<8x128xf32>
    %c0_9 = arith.constant 0 : index
    %c0_10 = arith.constant 0 : index
    %35 = vector.load %arg3[%c0_9, %c0_10] : memref<1x128xf32, #tpu.memory_space<vmem>>, vector<1x128xf32>
    %c0_11 = arith.constant 0 : index
    %c0_12 = arith.constant 0 : index
    %36 = vector.load %arg4[%c0_11, %c0_12] : memref<1x128xf32, #tpu.memory_space<vmem>>, vector<1x128xf32>
    %cst_13 = arith.constant dense<0.000000e+00> : vector<8xf32>
    %37 = vector.multi_reduction <add>, %33, %cst_13 [1] : vector<8x128xf32> to vector<8xf32>
    %38 = vector.shape_cast %37 : vector<8xf32> to vector<8x1xf32>
    %cst_14 = arith.constant 1.280000e+02 : f32
    %39 = vector.broadcast %cst_14 : f32 to vector<8x1xf32>
    %40 = arith.divf %38, %39 : vector<8x1xf32>
    %41 = vector.broadcast %40 : vector<8x1xf32> to vector<8x128xf32>
    %42 = arith.subf %33, %41 : vector<8x128xf32>
    %43 = vector.broadcast %40 : vector<8x1xf32> to vector<8x128xf32>
    %44 = arith.subf %33, %43 : vector<8x128xf32>
    %45 = arith.mulf %42, %44 : vector<8x128xf32>
    %cst_15 = arith.constant dense<0.000000e+00> : vector<8xf32>
    %46 = vector.multi_reduction <add>, %45, %cst_15 [1] : vector<8x128xf32> to vector<8xf32>
    %47 = vector.shape_cast %46 : vector<8xf32> to vector<8x1xf32>
    %cst_16 = arith.constant 1.280000e+02 : f32
    %48 = vector.broadcast %cst_16 : f32 to vector<8x1xf32>
    %49 = arith.divf %47, %48 : vector<8x1xf32>
    %50 = vector.broadcast %40 : vector<8x1xf32> to vector<8x128xf32>
    %51 = arith.subf %33, %50 : vector<8x128xf32>
    %cst_17 = arith.constant 9.99999974E-6 : f32
    %52 = vector.broadcast %cst_17 : f32 to vector<8x1xf32>
    %53 = arith.addf %49, %52 : vector<8x1xf32>
    %54 = math.rsqrt %53 : vector<8x1xf32>
    %55 = vector.broadcast %54 : vector<8x1xf32> to vector<8x128xf32>
    %56 = arith.mulf %51, %55 : vector<8x128xf32>
    %57 = vector.broadcast %35 : vector<1x128xf32> to vector<8x128xf32>
    %58 = arith.mulf %56, %57 : vector<8x128xf32>
    %59 = vector.broadcast %36 : vector<1x128xf32> to vector<8x128xf32>
    %60 = arith.addf %58, %59 : vector<8x128xf32>
    %61 = arith.mulf %60, %60 : vector<8x128xf32>
    %cst_18 = arith.constant dense<0.000000e+00> : vector<8xf32>
    %62 = vector.multi_reduction <add>, %61, %cst_18 [1] : vector<8x128xf32> to vector<8xf32>
    %63 = vector.shape_cast %62 : vector<8xf32> to vector<8x1xf32>
    %64 = math.rsqrt %63 : vector<8x1xf32>
    %65 = vector.broadcast %64 : vector<8x1xf32> to vector<8x128xf32>
    %66 = arith.mulf %60, %65 : vector<8x128xf32>
    %c0_19 = arith.constant 0 : index
    %c0_20 = arith.constant 0 : index
    %67 = vector.load %arg5[%c0_19, %c0_20] : memref<1x128xf32, #tpu.memory_space<vmem>>, vector<1x128xf32>
    %c0_21 = arith.constant 0 : index
    %c0_22 = arith.constant 0 : index
    %68 = vector.load %arg6[%c0_21, %c0_22] : memref<1x128xf32, #tpu.memory_space<vmem>>, vector<1x128xf32>
    %cst_23 = arith.constant dense<0.000000e+00> : vector<8xf32>
    %69 = vector.multi_reduction <add>, %34, %cst_23 [1] : vector<8x128xf32> to vector<8xf32>
    %70 = vector.shape_cast %69 : vector<8xf32> to vector<8x1xf32>
    %cst_24 = arith.constant 1.280000e+02 : f32
    %71 = vector.broadcast %cst_24 : f32 to vector<8x1xf32>
    %72 = arith.divf %70, %71 : vector<8x1xf32>
    %73 = vector.broadcast %72 : vector<8x1xf32> to vector<8x128xf32>
    %74 = arith.subf %34, %73 : vector<8x128xf32>
    %75 = vector.broadcast %72 : vector<8x1xf32> to vector<8x128xf32>
    %76 = arith.subf %34, %75 : vector<8x128xf32>
    %77 = arith.mulf %74, %76 : vector<8x128xf32>
    %cst_25 = arith.constant dense<0.000000e+00> : vector<8xf32>
    %78 = vector.multi_reduction <add>, %77, %cst_25 [1] : vector<8x128xf32> to vector<8xf32>
    %79 = vector.shape_cast %78 : vector<8xf32> to vector<8x1xf32>
    %cst_26 = arith.constant 1.280000e+02 : f32
    %80 = vector.broadcast %cst_26 : f32 to vector<8x1xf32>
    %81 = arith.divf %79, %80 : vector<8x1xf32>
    %82 = vector.broadcast %72 : vector<8x1xf32> to vector<8x128xf32>
    %83 = arith.subf %34, %82 : vector<8x128xf32>
    %cst_27 = arith.constant 9.99999974E-6 : f32
    %84 = vector.broadcast %cst_27 : f32 to vector<8x1xf32>
    %85 = arith.addf %81, %84 : vector<8x1xf32>
    %86 = math.rsqrt %85 : vector<8x1xf32>
    %87 = vector.broadcast %86 : vector<8x1xf32> to vector<8x128xf32>
    %88 = arith.mulf %83, %87 : vector<8x128xf32>
    %89 = vector.broadcast %67 : vector<1x128xf32> to vector<8x128xf32>
    %90 = arith.mulf %88, %89 : vector<8x128xf32>
    %91 = vector.broadcast %68 : vector<1x128xf32> to vector<8x128xf32>
    %92 = arith.addf %90, %91 : vector<8x128xf32>
    %93 = arith.mulf %92, %92 : vector<8x128xf32>
    %cst_28 = arith.constant dense<0.000000e+00> : vector<8xf32>
    %94 = vector.multi_reduction <add>, %93, %cst_28 [1] : vector<8x128xf32> to vector<8xf32>
    %95 = vector.shape_cast %94 : vector<8xf32> to vector<8x1xf32>
    %96 = math.rsqrt %95 : vector<8x1xf32>
    %97 = vector.broadcast %96 : vector<8x1xf32> to vector<8x128xf32>
    %98 = arith.mulf %92, %97 : vector<8x128xf32>
    %c0_29 = arith.constant 0 : index
    %99 = memref.load %arg7[%c0_29] : memref<1xf32, #tpu.memory_space<smem>>
    %100 = vector.broadcast %99 : f32 to vector<1x1xf32>
    %101 = math.exp %100 : vector<1x1xf32>
    %cst_30 = arith.constant 0.000000e+00 : f32
    %102 = vector.broadcast %cst_30 : f32 to vector<120x128xf32>
    %103 = tpu.concatenate %98, %102 in 0 : vector<8x128xf32>, vector<120x128xf32> -> vector<128x128xf32>
    %104 = tpu.concatenate %66, %102 in 0 : vector<8x128xf32>, vector<120x128xf32> -> vector<128x128xf32>
    %cst_31 = arith.constant dense<0.000000e+00> : vector<8x128xf32>
    %105 = tpu.matmul %66, %103, %cst_31 {dimension_numbers = #tpu.dot_dimension_numbers<[1], [1], [0], [0], [0, 0, 1, 0], [], []>} : vector<8x128xf32>, vector<128x128xf32>, vector<8x128xf32> -> vector<8x128xf32>
    %106 = vector.broadcast %101 : vector<1x1xf32> to vector<8x128xf32>
    %107 = arith.mulf %106, %105 : vector<8x128xf32>
    %cst_32 = arith.constant dense<0.000000e+00> : vector<8x128xf32>
    %108 = tpu.matmul %98, %104, %cst_32 {dimension_numbers = #tpu.dot_dimension_numbers<[1], [1], [0], [0], [0, 0, 1, 0], [], []>} : vector<8x128xf32>, vector<128x128xf32>, vector<8x128xf32> -> vector<8x128xf32>
    %109 = vector.broadcast %101 : vector<1x1xf32> to vector<8x128xf32>
    %110 = arith.mulf %109, %108 : vector<8x128xf32>
    %111 = tpu.iota {dimensions = array<i32: 0>} : vector<8x128xi32>
    %112 = tpu.iota {dimensions = array<i32: 1>} : vector<8x128xi32>
    %c8_i32 = arith.constant 8 : i32
    %113 = vector.broadcast %c8_i32 : i32 to vector<8x128xi32>
    %114 = arith.cmpi slt, %112, %113 : vector<8x128xi32>
    %cst_33 = arith.constant 0xFF800000 : f32
    %115 = vector.broadcast %cst_33 : f32 to vector<8x128xf32>
    %116 = arith.select %114, %107, %115 : vector<8x128xi1>, vector<8x128xf32>
    %cst_34 = arith.constant dense<0xFF800000> : vector<8xf32>
    %117 = vector.multi_reduction <maximumf>, %116, %cst_34 [1] : vector<8x128xf32> to vector<8xf32>
    %118 = vector.shape_cast %117 : vector<8xf32> to vector<8x1xf32>
    %119 = vector.broadcast %118 : vector<8x1xf32> to vector<8x128xf32>
    %120 = arith.subf %107, %119 : vector<8x128xf32>
    %121 = math.exp %120 : vector<8x128xf32>
    %cst_35 = arith.constant 0.000000e+00 : f32
    %122 = vector.broadcast %cst_35 : f32 to vector<8x128xf32>
    %123 = arith.select %114, %121, %122 : vector<8x128xi1>, vector<8x128xf32>
    %cst_36 = arith.constant dense<0.000000e+00> : vector<8xf32>
    %124 = vector.multi_reduction <add>, %123, %cst_36 [1] : vector<8x128xf32> to vector<8xf32>
    %125 = vector.shape_cast %124 : vector<8xf32> to vector<8x1xf32>
    %126 = math.log %125 : vector<8x1xf32>
    %127 = arith.addf %118, %126 : vector<8x1xf32>
    %128 = arith.cmpi eq, %112, %111 : vector<8x128xi32>
    %cst_37 = arith.constant 0.000000e+00 : f32
    %129 = vector.broadcast %cst_37 : f32 to vector<8x128xf32>
    %130 = arith.select %128, %107, %129 : vector<8x128xi1>, vector<8x128xf32>
    %cst_38 = arith.constant dense<0.000000e+00> : vector<8xf32>
    %131 = vector.multi_reduction <add>, %130, %cst_38 [1] : vector<8x128xf32> to vector<8xf32>
    %132 = vector.shape_cast %131 : vector<8xf32> to vector<8x1xf32>
    %133 = arith.subf %127, %132 : vector<8x1xf32>
    %134 = vector.shape_cast %133 : vector<8x1xf32> to vector<1x8x1xf32>
    %cst_39 = arith.constant dense<0.000000e+00> : vector<1xf32>
    %135 = vector.multi_reduction <add>, %134, %cst_39 [1, 2] : vector<1x8x1xf32> to vector<1xf32>
    %136 = vector.shape_cast %135 : vector<1xf32> to vector<1x1x1xf32>
    %137 = vector.extract %136[0, 0, 0] : f32 from vector<1x1x1xf32>
    %cst_40 = arith.constant 8.000000e+00 : f32
    %138 = arith.divf %137, %cst_40 : f32
    %cst_41 = arith.constant 0xFF800000 : f32
    %139 = vector.broadcast %cst_41 : f32 to vector<8x128xf32>
    %140 = arith.select %114, %110, %139 : vector<8x128xi1>, vector<8x128xf32>
    %cst_42 = arith.constant dense<0xFF800000> : vector<8xf32>
    %141 = vector.multi_reduction <maximumf>, %140, %cst_42 [1] : vector<8x128xf32> to vector<8xf32>
    %142 = vector.shape_cast %141 : vector<8xf32> to vector<8x1xf32>
    %143 = vector.broadcast %142 : vector<8x1xf32> to vector<8x128xf32>
    %144 = arith.subf %110, %143 : vector<8x128xf32>
    %145 = math.exp %144 : vector<8x128xf32>
    %cst_43 = arith.constant 0.000000e+00 : f32
    %146 = vector.broadcast %cst_43 : f32 to vector<8x128xf32>
    %147 = arith.select %114, %145, %146 : vector<8x128xi1>, vector<8x128xf32>
    %cst_44 = arith.constant dense<0.000000e+00> : vector<8xf32>
    %148 = vector.multi_reduction <add>, %147, %cst_44 [1] : vector<8x128xf32> to vector<8xf32>
    %149 = vector.shape_cast %148 : vector<8xf32> to vector<8x1xf32>
    %150 = math.log %149 : vector<8x1xf32>
    %151 = arith.addf %142, %150 : vector<8x1xf32>
    %152 = arith.cmpi eq, %112, %111 : vector<8x128xi32>
    %cst_45 = arith.constant 0.000000e+00 : f32
    %153 = vector.broadcast %cst_45 : f32 to vector<8x128xf32>
    %154 = arith.select %152, %110, %153 : vector<8x128xi1>, vector<8x128xf32>
    %cst_46 = arith.constant dense<0.000000e+00> : vector<8xf32>
    %155 = vector.multi_reduction <add>, %154, %cst_46 [1] : vector<8x128xf32> to vector<8xf32>
    %156 = vector.shape_cast %155 : vector<8xf32> to vector<8x1xf32>
    %157 = arith.subf %151, %156 : vector<8x1xf32>
    %158 = vector.shape_cast %157 : vector<8x1xf32> to vector<1x8x1xf32>
    %cst_47 = arith.constant dense<0.000000e+00> : vector<1xf32>
    %159 = vector.multi_reduction <add>, %158, %cst_47 [1, 2] : vector<1x8x1xf32> to vector<1xf32>
    %160 = vector.shape_cast %159 : vector<1xf32> to vector<1x1x1xf32>
    %161 = vector.extract %160[0, 0, 0] : f32 from vector<1x1x1xf32>
    %cst_48 = arith.constant 8.000000e+00 : f32
    %162 = arith.divf %161, %cst_48 : f32
    %163 = arith.addf %138, %162 : f32
    %cst_49 = arith.constant 0xFF800000 : f32
    %164 = vector.broadcast %cst_49 : f32 to vector<8x128xf32>
    %165 = arith.select %114, %107, %164 : vector<8x128xi1>, vector<8x128xf32>
    %cst_50 = arith.constant dense<0xFF800000> : vector<8xf32>
    %166 = vector.multi_reduction <maximumf>, %165, %cst_50 [1] : vector<8x128xf32> to vector<8xf32>
    %167 = vector.shape_cast %166 : vector<8xf32> to vector<8x1xf32>
    %168 = vector.broadcast %167 : vector<8x1xf32> to vector<8x128xf32>
    %169 = arith.cmpf oeq, %165, %168 : vector<8x128xf32>
    %c128_i32 = arith.constant 128 : i32
    %170 = vector.broadcast %c128_i32 : i32 to vector<8x128xi32>
    %171 = arith.select %169, %112, %170 : vector<8x128xi1>, vector<8x128xi32>
    %cst_51 = arith.constant dense<2147483647> : vector<8xi32>
    %172 = vector.multi_reduction <minsi>, %171, %cst_51 [1] : vector<8x128xi32> to vector<8xi32>
    %173 = vector.shape_cast %172 : vector<8xi32> to vector<8x1xi32>
    %174 = tpu.iota {dimensions = array<i32: 0>} : vector<8x1xi32>
    %175 = arith.cmpi eq, %173, %174 : vector<8x1xi32>
    %176 = arith.extui %175 : vector<8x1xi1> to vector<8x1xi32>
    %177 = arith.sitofp %176 : vector<8x1xi32> to vector<8x1xf32>
    %178 = vector.shape_cast %177 : vector<8x1xf32> to vector<1x8x1xf32>
    %cst_52 = arith.constant dense<0.000000e+00> : vector<1xf32>
    %179 = vector.multi_reduction <add>, %178, %cst_52 [1, 2] : vector<1x8x1xf32> to vector<1xf32>
    %180 = vector.shape_cast %179 : vector<1xf32> to vector<1x1x1xf32>
    %181 = vector.extract %180[0, 0, 0] : f32 from vector<1x1x1xf32>
    %cst_53 = arith.constant 8.000000e+00 : f32
    %182 = arith.divf %181, %cst_53 : f32
    %c0_i32 = arith.constant 0 : i32
    %183 = vector.broadcast %c0_i32 : i32 to vector<8x128xi32>
    %184 = arith.cmpi eq, %111, %183 : vector<8x128xi32>
    %c8_i32_54 = arith.constant 8 : i32
    %185 = vector.broadcast %c8_i32_54 : i32 to vector<8x128xi32>
    %186 = arith.cmpi eq, %112, %185 : vector<8x128xi32>
    %187 = arith.andi %184, %186 : vector<8x128xi1>
    %188 = vector.broadcast %163 : f32 to vector<8x128xf32>
    %189 = arith.select %187, %188, %107 : vector<8x128xi1>, vector<8x128xf32>
    %c0_i32_55 = arith.constant 0 : i32
    %190 = vector.broadcast %c0_i32_55 : i32 to vector<8x128xi32>
    %191 = arith.cmpi eq, %111, %190 : vector<8x128xi32>
    %c9_i32 = arith.constant 9 : i32
    %192 = vector.broadcast %c9_i32 : i32 to vector<8x128xi32>
    %193 = arith.cmpi eq, %112, %192 : vector<8x128xi32>
    %194 = arith.andi %191, %193 : vector<8x128xi1>
    %195 = vector.broadcast %182 : f32 to vector<8x128xf32>
    %196 = arith.select %194, %195, %189 : vector<8x128xi1>, vector<8x128xf32>
    %c0_56 = arith.constant 0 : index
    %c0_57 = arith.constant 0 : index
    %197 = vector.load %arg8[%c0_56, %c0_57] : memref<8x128xf32, #tpu.memory_space<vmem>>, vector<8x128xf32>
    tpu.vector_store %arg8[%c0_56, %c0_57], %196 {strides = array<i32>} : memref<8x128xf32, #tpu.memory_space<vmem>>, vector<8x128xf32>,
    return
  }
}

</mosaic_0001>

<llo_original>
// kernel: code_search_forward.1
$region0: #{code_search_forward.1}
  #allocation0 [shape = 'u32[]', space=smem, size = 0x4, offset = 0x4, fixed_abs, tag = 'smem constant byte address 0x4 - core index']
  #allocation1 [shape = 'u32[72,128]{1,0:T(1,128)}', space=vmem, size = 0x9000, scoped, tag = 'internal scratch']
  #allocation2 [shape = 'f32[1]{0:T(128)S(6)}', space=smem, size = 0x200, scoped, tag = 'scoped memory for code_search_forward.1']
  %s0 = inlined_call_operand.vmem [shape: s32[8,16], index: 0, kind: input, shape index: {}]
  %s1 = inlined_call_operand.vmem [shape: s32[8,16], index: 1, kind: input, shape index: {}]
  %s2 = inlined_call_operand.vmem [shape: f32[128,128], index: 2, kind: input, shape index: {}]
  %s3 = inlined_call_operand.vmem [shape: f32[1,128], index: 3, kind: input, shape index: {}]
  %s4 = inlined_call_operand.vmem [shape: f32[1,128], index: 4, kind: input, shape index: {}]
  %s5 = inlined_call_operand.vmem [shape: f32[1,128], index: 5, kind: input, shape index: {}]
  %s6 = inlined_call_operand.vmem [shape: f32[1,128], index: 6, kind: input, shape index: {}]
  %s7 = inlined_call_operand.<no memory space> [shape: f32[1], index: 7, kind: input, shape index: {}]
  %s8 = inlined_call_operand.vmem [shape: f32[8,128], index: 8, kind: output, shape index: {}]
  %s9 = sld [smem:[#allocation0]]
  $region42: #{code_search_forward.1} parent=0
    _
  %s11 = ssub.s32 1, %s9
  %s12 = scalar_select 0, %s11, %s9
  %13 = sst [smem:[#allocation2]] %s7
  // Predicated region
  $region2: #{code_search_forward.1} parent=0 // pred_check
    _
  $region3: #{code_search_forward.1} parent=0 // pred_check_branch
    %15 = sbr.rel (0) target = $region5
  $region4: #{code_search_forward.1} parent=0 // pred_region
    _
  $region5: #{code_search_forward.1} parent=0 // pred_fallthru
    _
  // Predicated region
  $region6: #{code_search_forward.1} parent=0 // pred_check
    _
  $region7: #{code_search_forward.1} parent=0 // pred_check_branch
    %17 = sbr.rel (0) target = $region9
  $region8: #{code_search_forward.1} parent=0 // pred_region
    _
  $region9: #{code_search_forward.1} parent=0 // pred_fallthru
    _
  // Predicated region
  $region10: #{code_search_forward.1} parent=0 // pred_check
    _
  $region11: #{code_search_forward.1} parent=0 // pred_check_branch
    %19 = sbr.rel (0) target = $region13
  $region12: #{code_search_forward.1} parent=0 // pred_region
    _
  $region13: #{code_search_forward.1} parent=0 // pred_fallthru
    _
  // Predicated region
  $region14: #{code_search_forward.1} parent=0 // pred_check
    _
  $region15: #{code_search_forward.1} parent=0 // pred_check_branch
    %21 = sbr.rel (0) target = $region17
  $region16: #{code_search_forward.1} parent=0 // pred_region
    _
  $region17: #{code_search_forward.1} parent=0 // pred_fallthru
    _
  // Predicated region
  $region18: #{code_search_forward.1} parent=0 // pred_check
    _
  $region19: #{code_search_forward.1} parent=0 // pred_check_branch
    %23 = sbr.rel (0) target = $region21
  $region20: #{code_search_forward.1} parent=0 // pred_region
    _
  $region21: #{code_search_forward.1} parent=0 // pred_fallthru
    _
  // Predicated region
  $region22: #{code_search_forward.1} parent=0 // pred_check
    _
  $region23: #{code_search_forward.1} parent=0 // pred_check_branch
    %25 = sbr.rel (0) target = $region25
  $region24: #{code_search_forward.1} parent=0 // pred_region
    _
  $region25: #{code_search_forward.1} parent=0 // pred_fallthru
    _
  // Predicated region
  $region26: #{code_search_forward.1} parent=0 // pred_check
    _
  $region27: #{code_search_forward.1} parent=0 // pred_check_branch
    %27 = sbr.rel (0) target = $region29
  $region28: #{code_search_forward.1} parent=0 // pred_region
    _
  $region29: #{code_search_forward.1} parent=0 // pred_fallthru
    _
  // Predicated region
  $region30: #{code_search_forward.1} parent=0 // pred_check
    _
  $region31: #{code_search_forward.1} parent=0 // pred_check_branch
    %29 = sbr.rel (0) target = $region33
  $region32: #{code_search_forward.1} parent=0 // pred_region
    _
  $region33: #{code_search_forward.1} parent=0 // pred_fallthru
    _
  %v30 = vld [vmem:[%s0] sm:$0xff]
  %v31 = vld [vmem:[%s1] sm:$0xff]
  %v32 = vadd.s32 %v31, 64
  %v33 = vlaneseq
  %v34 = vand.u32 %v33, 127
  %v35 = vperm.slane %v30, 0
  %v36 = vlaneseq
  %v37 = vshrl.u32 %v36, 7
  %39 = vset.pattern.permute.xlu0 %v37
  %40 = vperm.xlu0 %39, %v35
  %v41 = vpop.permute.xlu0 %40
  %v42 = vlaneseq
  %v43 = vshrl.u32 %v42, 7
  %v44 = vadd.s32 %v43, 8
  %45 = vset.pattern.permute.xlu0 %v44
  %46 = vperm.xlu0 %45, %v35
  %v47 = vpop.permute.xlu0 %46
  %v48 = vperm.slane %v30, 1
  %v49 = vlaneseq
  %v50 = vshrl.u32 %v49, 7
  %52 = vset.pattern.permute.xlu0 %v50
  %53 = vperm.xlu0 %52, %v48
  %v54 = vpop.permute.xlu0 %53
  %v55 = vlaneseq
  %v56 = vshrl.u32 %v55, 7
  %v57 = vadd.s32 %v56, 8
  %58 = vset.pattern.permute.xlu0 %v57
  %59 = vperm.xlu0 %58, %v48
  %v60 = vpop.permute.xlu0 %59
  %v61 = vperm.slane %v30, 2
  %v62 = vlaneseq
  %v63 = vshrl.u32 %v62, 7
  %65 = vset.pattern.permute.xlu0 %v63
  %66 = vperm.xlu0 %65, %v61
  %v67 = vpop.permute.xlu0 %66
  %v68 = vlaneseq
  %v69 = vshrl.u32 %v68, 7
  %v70 = vadd.s32 %v69, 8
  %71 = vset.pattern.permute.xlu0 %v70
  %72 = vperm.xlu0 %71, %v61
  %v73 = vpop.permute.xlu0 %72
  %v74 = vperm.slane %v30, 3
  %v75 = vlaneseq
  %v76 = vshrl.u32 %v75, 7
  %78 = vset.pattern.permute.xlu0 %v76
  %79 = vperm.xlu0 %78, %v74
  %v80 = vpop.permute.xlu0 %79
  %v81 = vlaneseq
  %v82 = vshrl.u32 %v81, 7
  %v83 = vadd.s32 %v82, 8
  %84 = vset.pattern.permute.xlu0 %v83
  %85 = vperm.xlu0 %84, %v74
  %v86 = vpop.permute.xlu0 %85
  %v87 = vperm.slane %v30, 4
  %v88 = vlaneseq
  %v89 = vshrl.u32 %v88, 7
  %91 = vset.pattern.permute.xlu0 %v89
  %92 = vperm.xlu0 %91, %v87
  %v93 = vpop.permute.xlu0 %92
  %v94 = vlaneseq
  %v95 = vshrl.u32 %v94, 7
  %v96 = vadd.s32 %v95, 8
  %97 = vset.pattern.permute.xlu0 %v96
  %98 = vperm.xlu0 %97, %v87
  %v99 = vpop.permute.xlu0 %98
  %v100 = vperm.slane %v30, 5
  %v101 = vlaneseq
  %v102 = vshrl.u32 %v101, 7
  %104 = vset.pattern.permute.xlu0 %v102
  %105 = vperm.xlu0 %104, %v100
  %v106 = vpop.permute.xlu0 %105
  %v107 = vlaneseq
  %v108 = vshrl.u32 %v107, 7
  %v109 = vadd.s32 %v108, 8
  %110 = vset.pattern.permute.xlu0 %v109
  %111 = vperm.xlu0 %110, %v100
  %v112 = vpop.permute.xlu0 %111
  %v113 = vperm.slane %v30, 6
  %v114 = vlaneseq
  %v115 = vshrl.u32 %v114, 7
  %117 = vset.pattern.permute.xlu0 %v115
  %118 = vperm.xlu0 %117, %v113
  %v119 = vpop.permute.xlu0 %118
  %v120 = vlaneseq
  %v121 = vshrl.u32 %v120, 7
  %v122 = vadd.s32 %v121, 8
  %123 = vset.pattern.permute.xlu0 %v122
  %124 = vperm.xlu0 %123, %v113
  %v125 = vpop.permute.xlu0 %124
  %v126 = vperm.slane %v30, 7
  %v127 = vlaneseq
  %v128 = vshrl.u32 %v127, 7
  %130 = vset.pattern.permute.xlu0 %v128
  %131 = vperm.xlu0 %130, %v126
  %v132 = vpop.permute.xlu0 %131
  %v133 = vlaneseq
  %v134 = vshrl.u32 %v133, 7
  %v135 = vadd.s32 %v134, 8
  %136 = vset.pattern.permute.xlu0 %v135
  %137 = vperm.xlu0 %136, %v126
  %v138 = vpop.permute.xlu0 %137
  %v139 = vperm.slane %v32, 0
  %v140 = vlaneseq
  %v141 = vshrl.u32 %v140, 7
  %143 = vset.pattern.permute.xlu0 %v141
  %144 = vperm.xlu0 %143, %v139
  %v145 = vpop.permute.xlu0 %144
  %v146 = vlaneseq
  %v147 = vshrl.u32 %v146, 7
  %v148 = vadd.s32 %v147, 8
  %149 = vset.pattern.permute.xlu0 %v148
  %150 = vperm.xlu0 %149, %v139
  %v151 = vpop.permute.xlu0 %150
  %v152 = vperm.slane %v32, 1
  %v153 = vlaneseq
  %v154 = vshrl.u32 %v153, 7
  %156 = vset.pattern.permute.xlu0 %v154
  %157 = vperm.xlu0 %156, %v152
  %v158 = vpop.permute.xlu0 %157
  %v159 = vlaneseq
  %v160 = vshrl.u32 %v159, 7
  %v161 = vadd.s32 %v160, 8
  %162 = vset.pattern.permute.xlu0 %v161
  %163 = vperm.xlu0 %162, %v152
  %v164 = vpop.permute.xlu0 %163
  %v165 = vperm.slane %v32, 2
  %v166 = vlaneseq
  %v167 = vshrl.u32 %v166, 7
  %169 = vset.pattern.permute.xlu0 %v167
  %170 = vperm.xlu0 %169, %v165
  %v171 = vpop.permute.xlu0 %170
  %v172 = vlaneseq
  %v173 = vshrl.u32 %v172, 7
  %v174 = vadd.s32 %v173, 8
  %175 = vset.pattern.permute.xlu0 %v174
  %176 = vperm.xlu0 %175, %v165
  %v177 = vpop.permute.xlu0 %176
  %v178 = vperm.slane %v32, 3
  %v179 = vlaneseq
  %v180 = vshrl.u32 %v179, 7
  %182 = vset.pattern.permute.xlu0 %v180
  %183 = vperm.xlu0 %182, %v178
  %v184 = vpop.permute.xlu0 %183
  %v185 = vlaneseq
  %v186 = vshrl.u32 %v185, 7
  %v187 = vadd.s32 %v186, 8
  %188 = vset.pattern.permute.xlu0 %v187
  %189 = vperm.xlu0 %188, %v178
  %v190 = vpop.permute.xlu0 %189
  %v191 = vperm.slane %v32, 4
  %v192 = vlaneseq
  %v193 = vshrl.u32 %v192, 7
  %195 = vset.pattern.permute.xlu0 %v193
  %196 = vperm.xlu0 %195, %v191
  %v197 = vpop.permute.xlu0 %196
  %v198 = vlaneseq
  %v199 = vshrl.u32 %v198, 7
  %v200 = vadd.s32 %v199, 8
  %201 = vset.pattern.permute.xlu0 %v200
  %202 = vperm.xlu0 %201, %v191
  %v203 = vpop.permute.xlu0 %202
  %v204 = vperm.slane %v32, 5
  %v205 = vlaneseq
  %v206 = vshrl.u32 %v205, 7
  %208 = vset.pattern.permute.xlu0 %v206
  %209 = vperm.xlu0 %208, %v204
  %v210 = vpop.permute.xlu0 %209
  %v211 = vlaneseq
  %v212 = vshrl.u32 %v211, 7
  %v213 = vadd.s32 %v212, 8
  %214 = vset.pattern.permute.xlu0 %v213
  %215 = vperm.xlu0 %214, %v204
  %v216 = vpop.permute.xlu0 %215
  %v217 = vperm.slane %v32, 6
  %v218 = vlaneseq
  %v219 = vshrl.u32 %v218, 7
  %221 = vset.pattern.permute.xlu0 %v219
  %222 = vperm.xlu0 %221, %v217
  %v223 = vpop.permute.xlu0 %222
  %v224 = vlaneseq
  %v225 = vshrl.u32 %v224, 7
  %v226 = vadd.s32 %v225, 8
  %227 = vset.pattern.permute.xlu0 %v226
  %228 = vperm.xlu0 %227, %v217
  %v229 = vpop.permute.xlu0 %228
  %v230 = vperm.slane %v32, 7
  %v231 = vlaneseq
  %v232 = vshrl.u32 %v231, 7
  %234 = vset.pattern.permute.xlu0 %v232
  %235 = vperm.xlu0 %234, %v230
  %v236 = vpop.permute.xlu0 %235
  %v237 = vlaneseq
  %v238 = vshrl.u32 %v237, 7
  %v239 = vadd.s32 %v238, 8
  %240 = vset.pattern.permute.xlu0 %v239
  %241 = vperm.xlu0 %240, %v230
  %v242 = vpop.permute.xlu0 %241
  %vm243 = vcmp.eq.s32.totalorder %v41, %v34
  %vm244 = vcmp.eq.s32.totalorder %v47, %v34
  %vm245 = vcmp.eq.s32.totalorder %v54, %v34
  %vm246 = vcmp.eq.s32.totalorder %v60, %v34
  %vm247 = vcmp.eq.s32.totalorder %v67, %v34
  %vm248 = vcmp.eq.s32.totalorder %v73, %v34
  %vm249 = vcmp.eq.s32.totalorder %v80, %v34
  %vm250 = vcmp.eq.s32.totalorder %v86, %v34
  %vm251 = vcmp.eq.s32.totalorder %v93, %v34
  %vm252 = vcmp.eq.s32.totalorder %v99, %v34
  %vm253 = vcmp.eq.s32.totalorder %v106, %v34
  %vm254 = vcmp.eq.s32.totalorder %v112, %v34
  %vm255 = vcmp.eq.s32.totalorder %v119, %v34
  %vm256 = vcmp.eq.s32.totalorder %v125, %v34
  %vm257 = vcmp.eq.s32.totalorder %v132, %v34
  %vm258 = vcmp.eq.s32.totalorder %v138, %v34
  %vm259 = vcmp.eq.s32.totalorder %v145, %v34
  %vm260 = vcmp.eq.s32.totalorder %v151, %v34
  %vm261 = vcmp.eq.s32.totalorder %v158, %v34
  %vm262 = vcmp.eq.s32.totalorder %v164, %v34
  %vm263 = vcmp.eq.s32.totalorder %v171, %v34
  %vm264 = vcmp.eq.s32.totalorder %v177, %v34
  %vm265 = vcmp.eq.s32.totalorder %v184, %v34
  %vm266 = vcmp.eq.s32.totalorder %v190, %v34
  %vm267 = vcmp.eq.s32.totalorder %v197, %v34
  %vm268 = vcmp.eq.s32.totalorder %v203, %v34
  %vm269 = vcmp.eq.s32.totalorder %v210, %v34
  %vm270 = vcmp.eq.s32.totalorder %v216, %v34
  %vm271 = vcmp.eq.s32.totalorder %v223, %v34
  %vm272 = vcmp.eq.s32.totalorder %v229, %v34
  %vm273 = vcmp.eq.s32.totalorder %v236, %v34
  %vm274 = vcmp.eq.s32.totalorder %v242, %v34
  %v275 = vsel %vm243, 1, 0
  %v276 = vsel %vm244, 1, 0
  %v277 = vsel %vm245, 1, 0
  %v278 = vsel %vm246, 1, 0
  %v279 = vsel %vm247, 1, 0
  %v280 = vsel %vm248, 1, 0
  %v281 = vsel %vm249, 1, 0
  %v282 = vsel %vm250, 1, 0
  %v283 = vsel %vm251, 1, 0
  %v284 = vsel %vm252, 1, 0
  %v285 = vsel %vm253, 1, 0
  %v286 = vsel %vm254, 1, 0
  %v287 = vsel %vm255, 1, 0
  %v288 = vsel %vm256, 1, 0
  %v289 = vsel %vm257, 1, 0
  %v290 = vsel %vm258, 1, 0
  %v291 = vsel %vm259, 1, 0
  %v292 = vsel %vm260, 1, 0
  %v293 = vsel %vm261, 1, 0
  %v294 = vsel %vm262, 1, 0
  %v295 = vsel %vm263, 1, 0
  %v296 = vsel %vm264, 1, 0
  %v297 = vsel %vm265, 1, 0
  %v298 = vsel %vm266, 1, 0
  %v299 = vsel %vm267, 1, 0
  %v300 = vsel %vm268, 1, 0
  %v301 = vsel %vm269, 1, 0
  %v302 = vsel %vm270, 1, 0
  %v303 = vsel %vm271, 1, 0
  %v304 = vsel %vm272, 1, 0
  %v305 = vsel %vm273, 1, 0
  %v306 = vsel %vm274, 1, 0
  %v307 = vcvt.s32.f32 %v275
  %v308 = vcvt.s32.f32 %v276
  %v309 = vcvt.s32.f32 %v277
  %v310 = vcvt.s32.f32 %v278
  %v311 = vcvt.s32.f32 %v279
  %v312 = vcvt.s32.f32 %v280
  %v313 = vcvt.s32.f32 %v281
  %v314 = vcvt.s32.f32 %v282
  %v315 = vcvt.s32.f32 %v283
  %v316 = vcvt.s32.f32 %v284
  %v317 = vcvt.s32.f32 %v285
  %v318 = vcvt.s32.f32 %v286
  %v319 = vcvt.s32.f32 %v287
  %v320 = vcvt.s32.f32 %v288
  %v321 = vcvt.s32.f32 %v289
  %v322 = vcvt.s32.f32 %v290
  %v323 = vcvt.s32.f32 %v291
  %v324 = vcvt.s32.f32 %v292
  %v325 = vcvt.s32.f32 %v293
  %v326 = vcvt.s32.f32 %v294
  %v327 = vcvt.s32.f32 %v295
  %v328 = vcvt.s32.f32 %v296
  %v329 = vcvt.s32.f32 %v297
  %v330 = vcvt.s32.f32 %v298
  %v331 = vcvt.s32.f32 %v299
  %v332 = vcvt.s32.f32 %v300
  %v333 = vcvt.s32.f32 %v301
  %v334 = vcvt.s32.f32 %v302
  %v335 = vcvt.s32.f32 %v303
  %v336 = vcvt.s32.f32 %v304
  %v337 = vcvt.s32.f32 %v305
  %v338 = vcvt.s32.f32 %v306
  %v339 = vld [vmem:[%s2] sm:$0xff]
  %v340 = vld [vmem:[%s2 + $0x8] sm:$0xff]
  %v341 = vld [vmem:[%s2 + $0x10] sm:$0xff]
  %v342 = vld [vmem:[%s2 + $0x18] sm:$0xff]
  %v343 = vld [vmem:[%s2 + $0x20] sm:$0xff]
  %v344 = vld [vmem:[%s2 + $0x28] sm:$0xff]
  %v345 = vld [vmem:[%s2 + $0x30] sm:$0xff]
  %v346 = vld [vmem:[%s2 + $0x38] sm:$0xff]
  %v347 = vld [vmem:[%s2 + $0x40] sm:$0xff]
  %v348 = vld [vmem:[%s2 + $0x48] sm:$0xff]
  %v349 = vld [vmem:[%s2 + $0x50] sm:$0xff]
  %v350 = vld [vmem:[%s2 + $0x58] sm:$0xff]
  %v351 = vld [vmem:[%s2 + $0x60] sm:$0xff]
  %v352 = vld [vmem:[%s2 + $0x68] sm:$0xff]
  %v353 = vld [vmem:[%s2 + $0x70] sm:$0xff]
  %v354 = vld [vmem:[%s2 + $0x78] sm:$0xff]
  %355 = vmatpush.msra.mxu0 %v354
  %356 = vmatpush.msra.mxu0 %v353
  %357 = vmatpush.msra.mxu0 %v352
  %358 = vmatpush.msra.mxu0 %v351
  %359 = vmatpush.msra.mxu0 %v350
  %360 = vmatpush.msra.mxu0 %v349
  %361 = vmatpush.msra.mxu0 %v348
  %362 = vmatpush.msra.mxu0 %v347
  %363 = vmatpush.msra.mxu0 %v346
  %364 = vmatpush.msra.mxu0 %v345
  %365 = vmatpush.msra.mxu0 %v344
  %366 = vmatpush.msra.mxu0 %v343
  %367 = vmatpush.msra.mxu0 %v342
  %368 = vmatpush.msra.mxu0 %v341
  %369 = vmatpush.msra.mxu0 %v340
  %370 = vmatpush.msra.mxu0 %v339
  %371 = vmatmul.f32.gmra.mxu0 %v307
  %v372 = vpop.f32.mrf.mxu0
  %v373 = vadd.f32 0.0, %v372
  %374 = vmatmul.f32.gmra.mxu0 %v308
  %v375 = vpop.f32.mrf.mxu0
  %v376 = vadd.f32 0.0, %v375
  %377 = vmatmul.f32.gmra.mxu0 %v309
  %v378 = vpop.f32.mrf.mxu0
  %v379 = vadd.f32 0.0, %v378
  %380 = vmatmul.f32.gmra.mxu0 %v310
  %v381 = vpop.f32.mrf.mxu0
  %v382 = vadd.f32 0.0, %v381
  %383 = vmatmul.f32.gmra.mxu0 %v311
  %v384 = vpop.f32.mrf.mxu0
  %v385 = vadd.f32 0.0, %v384
  %386 = vmatmul.f32.gmra.mxu0 %v312
  %v387 = vpop.f32.mrf.mxu0
  %v388 = vadd.f32 0.0, %v387
  %389 = vmatmul.f32.gmra.mxu0 %v313
  %v390 = vpop.f32.mrf.mxu0
  %v391 = vadd.f32 0.0, %v390
  %392 = vmatmul.f32.gmra.mxu0 %v314
  %v393 = vpop.f32.mrf.mxu0
  %v394 = vadd.f32 0.0, %v393
  %395 = vmatmul.f32.gmra.mxu0 %v315
  %v396 = vpop.f32.mrf.mxu0
  %v397 = vadd.f32 0.0, %v396
  %398 = vmatmul.f32.gmra.mxu0 %v316
  %v399 = vpop.f32.mrf.mxu0
  %v400 = vadd.f32 0.0, %v399
  %401 = vmatmul.f32.gmra.mxu0 %v317
  %v402 = vpop.f32.mrf.mxu0
  %v403 = vadd.f32 0.0, %v402
  %404 = vmatmul.f32.gmra.mxu0 %v318
  %v405 = vpop.f32.mrf.mxu0
  %v406 = vadd.f32 0.0, %v405
  %407 = vmatmul.f32.gmra.mxu0 %v319
  %v408 = vpop.f32.mrf.mxu0
  %v409 = vadd.f32 0.0, %v408
  %410 = vmatmul.f32.gmra.mxu0 %v320
  %v411 = vpop.f32.mrf.mxu0
  %v412 = vadd.f32 0.0, %v411
  %413 = vmatmul.f32.gmra.mxu0 %v321
  %v414 = vpop.f32.mrf.mxu0
  %v415 = vadd.f32 0.0, %v414
  %416 = vmatmul.f32.gmra.mxu0 %v322
  %v417 = vpop.f32.mrf.mxu0
  %v418 = vadd.f32 0.0, %v417
  %419 = vmatmul.f32.gmra.mxu0 %v323
  %v420 = vpop.f32.mrf.mxu0
  %v421 = vadd.f32 0.0, %v420
  %422 = vmatmul.f32.gmra.mxu0 %v324
  %v423 = vpop.f32.mrf.mxu0
  %v424 = vadd.f32 0.0, %v423
  %425 = vmatmul.f32.gmra.mxu0 %v325
  %v426 = vpop.f32.mrf.mxu0
  %v427 = vadd.f32 0.0, %v426
  %428 = vmatmul.f32.gmra.mxu0 %v326
  %v429 = vpop.f32.mrf.mxu0
  %v430 = vadd.f32 0.0, %v429
  %431 = vmatmul.f32.gmra.mxu0 %v327
  %v432 = vpop.f32.mrf.mxu0
  %v433 = vadd.f32 0.0, %v432
  %434 = vmatmul.f32.gmra.mxu0 %v328
  %v435 = vpop.f32.mrf.mxu0
  %v436 = vadd.f32 0.0, %v435
  %437 = vmatmul.f32.gmra.mxu0 %v329
  %v438 = vpop.f32.mrf.mxu0
  %v439 = vadd.f32 0.0, %v438
  %440 = vmatmul.f32.gmra.mxu0 %v330
  %v441 = vpop.f32.mrf.mxu0
  %v442 = vadd.f32 0.0, %v441
  %443 = vmatmul.f32.gmra.mxu0 %v331
  %v444 = vpop.f32.mrf.mxu0
  %v445 = vadd.f32 0.0, %v444
  %446 = vmatmul.f32.gmra.mxu0 %v332
  %v447 = vpop.f32.mrf.mxu0
  %v448 = vadd.f32 0.0, %v447
  %449 = vmatmul.f32.gmra.mxu0 %v333
  %v450 = vpop.f32.mrf.mxu0
  %v451 = vadd.f32 0.0, %v450
  %452 = vmatmul.f32.gmra.mxu0 %v334
  %v453 = vpop.f32.mrf.mxu0
  %v454 = vadd.f32 0.0, %v453
  %455 = vmatmul.f32.gmra.mxu0 %v335
  %v456 = vpop.f32.mrf.mxu0
  %v457 = vadd.f32 0.0, %v456
  %458 = vmatmul.f32.gmra.mxu0 %v336
  %v459 = vpop.f32.mrf.mxu0
  %v460 = vadd.f32 0.0, %v459
  %461 = vmatmul.f32.gmra.mxu0 %v337
  %v462 = vpop.f32.mrf.mxu0
  %v463 = vadd.f32 0.0, %v462
  %464 = vmatmul.f32.gmra.mxu0 %v338
  %v465 = vpop.f32.mrf.mxu0
  %v466 = vadd.f32 0.0, %v465
  %467 = vdwg.mxu0
  %vm468 = vcmask 130048
  %v469 = vsel %vm468, %v30, 2147483648
  %v470 = vand.u32 %v469, 65535
  %v471 = vshra.s32 %v469, 16
  %v472 = vcvt.s32.f32 %v470
  %v473 = vcvt.s32.f32 %v471
  %474 = vmax.xlane.f32.xlu0 %v473
  %v475 = vpop.xlane.xlu0 %474
  %vm476 = vcmp.eq.f32.partialorder %v473, %v475
  %v477 = vsel %vm476, %v472, -inf
  %478 = vmax.xlane.f32.xlu0 %v477
  %v479 = vpop.xlane.xlu0 %478
  %v480 = vcvt.f32.s32 %v479
  %v481 = vcvt.f32.s32 %v475
  %v482 = vshll.u32 %v481, 16
  %v483 = vadd.s32 %v482, %v480
  %v484 = vsel %vm468, %v32, 2147483648
  %v485 = vand.u32 %v484, 65535
  %v486 = vshra.s32 %v484, 16
  %v487 = vcvt.s32.f32 %v485
  %v488 = vcvt.s32.f32 %v486
  %489 = vmax.xlane.f32.xlu0 %v488
  %v490 = vpop.xlane.xlu0 %489
  %vm491 = vcmp.eq.f32.partialorder %v488, %v490
  %v492 = vsel %vm491, %v487, -inf
  %493 = vmax.xlane.f32.xlu0 %v492
  %v494 = vpop.xlane.xlu0 %493
  %v495 = vcvt.f32.s32 %v494
  %v496 = vcvt.f32.s32 %v490
  %v497 = vshll.u32 %v496, 16
  %v498 = vadd.s32 %v497, %v495
  %vm499 = vcmp.eq.s32.totalorder %v30, %v483
  %vm500 = vcmp.eq.s32.totalorder %v32, %v498
  %v501 = vsel %vm499, %v34, 16
  %v502 = vsel %vm500, %v34, 16
  %v503 = vsel %vm468, %v501, 2147483647
  %v504 = vand.u32 %v503, 65535
  %v505 = vshra.s32 %v503, 16
  %v506 = vcvt.s32.f32 %v504
  %v507 = vcvt.s32.f32 %v505
  %508 = vmin.xlane.f32.xlu0 %v507
  %v509 = vpop.xlane.xlu0 %508
  %vm510 = vcmp.eq.f32.partialorder %v507, %v509
  %v511 = vsel %vm510, %v506, inf
  %512 = vmin.xlane.f32.xlu0 %v511
  %v513 = vpop.xlane.xlu0 %512
  %v514 = vcvt.f32.s32 %v513
  %v515 = vcvt.f32.s32 %v509
  %v516 = vshll.u32 %v515, 16
  %v517 = vadd.s32 %v516, %v514
  %v518 = vsel %vm468, %v502, 2147483647
  %v519 = vand.u32 %v518, 65535
  %v520 = vshra.s32 %v518, 16
  %v521 = vcvt.s32.f32 %v519
  %v522 = vcvt.s32.f32 %v520
  %523 = vmin.xlane.f32.xlu0 %v522
  %v524 = vpop.xlane.xlu0 %523
  %vm525 = vcmp.eq.f32.partialorder %v522, %v524
  %v526 = vsel %vm525, %v521, inf
  %527 = vmin.xlane.f32.xlu0 %v526
  %v528 = vpop.xlane.xlu0 %527
  %v529 = vcvt.f32.s32 %v528
  %v530 = vcvt.f32.s32 %v524
  %v531 = vshll.u32 %v530, 16
  %v532 = vadd.s32 %v531, %v529
  %v533 = vlaneseq
  %v534 = vshrl.u32 %v533, 7
  %v535 = vadd.s32 %v534, 8
  %v536 = vmul.u32 %v534, 16
  %v537 = vmul.u32 %v535, 16
  %v538 = vadd.s32 %v536, %v517
  %v539 = vadd.s32 %v537, %v532
  %v540 = vadd.s32 %v34, 128
  %vm541 = vcmp.eq.s32.totalorder %v34, %v538
  %vm542 = vcmp.eq.s32.totalorder %v540, %v538
  %vm543 = vcmp.eq.s32.totalorder %v34, %v539
  %vm544 = vcmp.eq.s32.totalorder %v540, %v539
  %v545 = vsel %vm541, 1, 0
  %v546 = vsel %vm542, 1, 0
  %v547 = vsel %vm543, 1, 0
  %v548 = vsel %vm544, 1, 0
  %v549 = vcvt.s32.f32 %v545
  %v550 = vcvt.s32.f32 %v546
  %v551 = vcvt.s32.f32 %v547
  %v552 = vcvt.s32.f32 %v548
  %553 = vmatpush.msra.mxu0 %v418
  %554 = vmatpush.msra.mxu0 %v415
  %555 = vmatpush.msra.mxu0 %v412
  %556 = vmatpush.msra.mxu0 %v409
  %557 = vmatpush.msra.mxu0 %v406
  %558 = vmatpush.msra.mxu0 %v403
  %559 = vmatpush.msra.mxu0 %v400
  %560 = vmatpush.msra.mxu0 %v397
  %561 = vmatpush.msra.mxu0 %v394
  %562 = vmatpush.msra.mxu0 %v391
  %563 = vmatpush.msra.mxu0 %v388
  %564 = vmatpush.msra.mxu0 %v385
  %565 = vmatpush.msra.mxu0 %v382
  %566 = vmatpush.msra.mxu0 %v379
  %567 = vmatpush.msra.mxu0 %v376
  %568 = vmatpush.msra.mxu0 %v373
  %569 = vmatmul.f32.gmra.mxu0 %v549
  %v570 = vpop.f32.mrf.mxu0
  %v571 = vadd.f32 0.0, %v570
  %572 = vmatmul.f32.gmra.mxu0 %v551
  %v573 = vpop.f32.mrf.mxu0
  %v574 = vadd.f32 0.0, %v573
  %575 = vdwg.mxu0
  %576 = vmatpush.msra.mxu0 %v466
  %577 = vmatpush.msra.mxu0 %v463
  %578 = vmatpush.msra.mxu0 %v460
  %579 = vmatpush.msra.mxu0 %v457
  %580 = vmatpush.msra.mxu0 %v454
  %581 = vmatpush.msra.mxu0 %v451
  %582 = vmatpush.msra.mxu0 %v448
  %583 = vmatpush.msra.mxu0 %v445
  %584 = vmatpush.msra.mxu0 %v442
  %585 = vmatpush.msra.mxu0 %v439
  %586 = vmatpush.msra.mxu0 %v436
  %587 = vmatpush.msra.mxu0 %v433
  %588 = vmatpush.msra.mxu0 %v430
  %589 = vmatpush.msra.mxu0 %v427
  %590 = vmatpush.msra.mxu0 %v424
  %591 = vmatpush.msra.mxu0 %v421
  %592 = vmatmul.f32.gmra.mxu0 %v550
  %v593 = vpop.f32.mrf.mxu0
  %v594 = vadd.f32 %v571, %v593
  %595 = vmatmul.f32.gmra.mxu0 %v552
  %v596 = vpop.f32.mrf.mxu0
  %v597 = vadd.f32 %v574, %v596
  %598 = vdwg.mxu0
  %v599 = vld [vmem:[%s3] sm:$0x1]
  %v600 = vld [vmem:[%s4] sm:$0x1]
  %601 = vadd.xlane.f32.xlu0 %v594
  %v602 = vpop.xlane.xlu0 %601
  %v603 = vrcp.pop 128.0
  %v604 = vmul.f32 128.0, %v603
  %v605 = vsub.f32 1.0, %v604
  %v606 = vmul.f32 %v603, %v605
  %v607 = vadd.f32 %v603, %v606
  %vm608 = vweird.f32 %v603
  %v609 = vsel %vm608, %v603, %v607
  %v610 = vmul.f32 %v602, %v609
  %v611 = vsub.f32 %v594, %v610
  %v612 = vmul.f32 %v611, %v611
  %613 = vadd.xlane.f32.xlu0 %v612
  %v614 = vpop.xlane.xlu0 %613
  %v615 = vmul.f32 %v614, %v609
  %v616 = vadd.f32 %v615, 1e-05
  %v617 = vrsqrt.pop %v616
  %v618 = vmul.f32 %v617, %v616
  %v619 = vmul.f32 %v618, %v617
  %v620 = vmul.f32 0.5, %v619
  %v621 = vsub.f32 1.5, %v620
  %v622 = vmul.f32 %v617, %v621
  %vm623 = vweird.f32 %v616
  %vm624 = vweird.f32 %v617
  %vm625 = vmor %vm623, %vm624
  %v626 = vsel %vm625, %v617, %v622
  %v627 = vmul.f32 %v611, %v626
  %v629 = vperm.slane %v599, 0
  %v631 = vmul.f32 %v627, %v629
  %v633 = vperm.slane %v600, 0
  %v635 = vadd.f32 %v631, %v633
  %v636 = vmul.f32 %v635, %v635
  %637 = vadd.xlane.f32.xlu0 %v636
  %v638 = vpop.xlane.xlu0 %637
  %v639 = vrsqrt.pop %v638
  %v640 = vmul.f32 %v639, %v638
  %v641 = vmul.f32 %v640, %v639
  %v642 = vmul.f32 0.5, %v641
  %v643 = vsub.f32 1.5, %v642
  %v644 = vmul.f32 %v639, %v643
  %vm645 = vweird.f32 %v638
  %vm646 = vweird.f32 %v639
  %vm647 = vmor %vm645, %vm646
  %v648 = vsel %vm647, %v639, %v644
  %v649 = vmul.f32 %v635, %v648
  %v650 = vld [vmem:[%s5] sm:$0x1]
  %v651 = vld [vmem:[%s6] sm:$0x1]
  %652 = vadd.xlane.f32.xlu0 %v597
  %v653 = vpop.xlane.xlu0 %652
  %v654 = vmul.f32 %v653, %v609
  %v655 = vsub.f32 %v597, %v654
  %v656 = vmul.f32 %v655, %v655
  %657 = vadd.xlane.f32.xlu0 %v656
  %v658 = vpop.xlane.xlu0 %657
  %v659 = vmul.f32 %v658, %v609
  %v660 = vadd.f32 %v659, 1e-05
  %v661 = vrsqrt.pop %v660
  %v662 = vmul.f32 %v661, %v660
  %v663 = vmul.f32 %v662, %v661
  %v664 = vmul.f32 0.5, %v663
  %v665 = vsub.f32 1.5, %v664
  %v666 = vmul.f32 %v661, %v665
  %vm667 = vweird.f32 %v660
  %vm668 = vweird.f32 %v661
  %vm669 = vmor %vm667, %vm668
  %v670 = vsel %vm669, %v661, %v666
  %v671 = vmul.f32 %v655, %v670
  %v673 = vperm.slane %v650, 0
  %v675 = vmul.f32 %v671, %v673
  %v677 = vperm.slane %v651, 0
  %v679 = vadd.f32 %v675, %v677
  %v680 = vmul.f32 %v679, %v679
  %681 = vadd.xlane.f32.xlu0 %v680
  %v682 = vpop.xlane.xlu0 %681
  %v683 = vrsqrt.pop %v682
  %v684 = vmul.f32 %v683, %v682
  %v685 = vmul.f32 %v684, %v683
  %v686 = vmul.f32 0.5, %v685
  %v687 = vsub.f32 1.5, %v686
  %v688 = vmul.f32 %v683, %v687
  %vm689 = vweird.f32 %v682
  %vm690 = vweird.f32 %v683
  %vm691 = vmor %vm689, %vm690
  %v692 = vsel %vm691, %v683, %v688
  %v693 = vmul.f32 %v679, %v692
  %s694 = sld [smem:[#allocation2]]
  %v695 = vstv %s694
  %v696 = vmul.f32 %v695, 1.442695
  %v697 = vpow.pop %v696
  %698 = vmatpush.xpose.msra.mxu0 0.0
  %699 = vmatpush.xpose.msra.mxu0 0.0
  %700 = vmatpush.xpose.msra.mxu0 0.0
  %701 = vmatpush.xpose.msra.mxu0 0.0
  %702 = vmatpush.xpose.msra.mxu0 0.0
  %703 = vmatpush.xpose.msra.mxu0 0.0
  %704 = vmatpush.xpose.msra.mxu0 0.0
  %705 = vmatpush.xpose.msra.mxu0 0.0
  %706 = vmatpush.xpose.msra.mxu0 0.0
  %707 = vmatpush.xpose.msra.mxu0 0.0
  %708 = vmatpush.xpose.msra.mxu0 0.0
  %709 = vmatpush.xpose.msra.mxu0 0.0
  %710 = vmatpush.xpose.msra.mxu0 0.0
  %711 = vmatpush.xpose.msra.mxu0 0.0
  %712 = vmatpush.xpose.msra.mxu0 0.0
  %713 = vmatpush.xpose.msra.mxu0 %v693
  %714 = vmatmul.f32.gmra.mxu0 %v649
  %v715 = vpop.f32.mrf.mxu0
  %v716 = vadd.f32 0.0, %v715
  %717 = vdwg.mxu0
  %v718 = vmul.f32 %v697, %v716
  %719 = vmatpush.xpose.msra.mxu0 0.0
  %720 = vmatpush.xpose.msra.mxu0 0.0
  %721 = vmatpush.xpose.msra.mxu0 0.0
  %722 = vmatpush.xpose.msra.mxu0 0.0
  %723 = vmatpush.xpose.msra.mxu0 0.0
  %724 = vmatpush.xpose.msra.mxu0 0.0
  %725 = vmatpush.xpose.msra.mxu0 0.0
  %726 = vmatpush.xpose.msra.mxu0 0.0
  %727 = vmatpush.xpose.msra.mxu0 0.0
  %728 = vmatpush.xpose.msra.mxu0 0.0
  %729 = vmatpush.xpose.msra.mxu0 0.0
  %730 = vmatpush.xpose.msra.mxu0 0.0
  %731 = vmatpush.xpose.msra.mxu0 0.0
  %732 = vmatpush.xpose.msra.mxu0 0.0
  %733 = vmatpush.xpose.msra.mxu0 0.0
  %734 = vmatpush.xpose.msra.mxu0 %v649
  %735 = vmatmul.f32.gmra.mxu0 %v693
  %v736 = vpop.f32.mrf.mxu0
  %v737 = vadd.f32 0.0, %v736
  %738 = vdwg.mxu0
  %v739 = vmul.f32 %v697, %v737
  %vm740 = vcmp.lt.s32.totalorder %v34, 8
  %v741 = vsel %vm740, %v718, -inf
  %742 = vmax.xlane.f32.xlu0 %v741
  %v743 = vpop.xlane.xlu0 %742
  %v744 = vsub.f32 %v718, %v743
  %v745 = vmul.f32 %v744, 1.442695
  %v746 = vpow.pop %v745
  %v747 = vsel %vm740, %v746, 0.0
  %748 = vadd.xlane.f32.xlu0 %v747
  %v749 = vpop.xlane.xlu0 %748
  %v750 = vlog2.pop %v749
  %v751 = vmul.f32 %v750, 0.6931472
  %v752 = vadd.f32 %v743, %v751
  %vm753 = vcmp.eq.s32.totalorder %v34, %v534
  %v754 = vsel %vm753, %v718, 0.0
  %755 = vadd.xlane.f32.xlu0 %v754
  %v756 = vpop.xlane.xlu0 %755
  %v757 = vsub.f32 %v752, %v756
  %vm758 = vcmask 7168
  %v759 = vsel %vm758, %v757, 0.0
  %760 = vadd.xlane.f32.xlu0 %v759
  %v761 = vpop.xlane.xlu0 %760
  %v762 = vrot.slane %v761, 4
  %v763 = vadd.f32 %v761, %v762
  %v764 = vrot.slane %v763, 2
  %v765 = vadd.f32 %v763, %v764
  %v766 = vrot.slane %v765, 1
  %v767 = vadd.f32 %v765, %v766
  %s768 = vtos %v767
  %v769 = vrcp.pop 8.0
  %v770 = vmul.f32 8.0, %v769
  %v771 = vsub.f32 1.0, %v770
  %v772 = vmul.f32 %v769, %v771
  %v773 = vadd.f32 %v769, %v772
  %vm774 = vweird.f32 %v769
  %v775 = vsel %vm774, %v769, %v773
  %s776 = vtos %v775
  %s777 = smul.f32 %s768, %s776
  %v778 = vsel %vm740, %v739, -inf
  %779 = vmax.xlane.f32.xlu0 %v778
  %v780 = vpop.xlane.xlu0 %779
  %v781 = vsub.f32 %v739, %v780
  %v782 = vmul.f32 %v781, 1.442695
  %v783 = vpow.pop %v782
  %v784 = vsel %vm740, %v783, 0.0
  %785 = vadd.xlane.f32.xlu0 %v784
  %v786 = vpop.xlane.xlu0 %785
  %v787 = vlog2.pop %v786
  %v788 = vmul.f32 %v787, 0.6931472
  %v789 = vadd.f32 %v780, %v788
  %v790 = vsel %vm753, %v739, 0.0
  %791 = vadd.xlane.f32.xlu0 %v790
  %v792 = vpop.xlane.xlu0 %791
  %v793 = vsub.f32 %v789, %v792
  %v794 = vsel %vm758, %v793, 0.0
  %795 = vadd.xlane.f32.xlu0 %v794
  %v796 = vpop.xlane.xlu0 %795
  %v797 = vrot.slane %v796, 4
  %v798 = vadd.f32 %v796, %v797
  %v799 = vrot.slane %v798, 2
  %v800 = vadd.f32 %v798, %v799
  %v801 = vrot.slane %v800, 1
  %v802 = vadd.f32 %v800, %v801
  %s803 = vtos %v802
  %v804 = vrcp.pop 8.0
  %v805 = vmul.f32 8.0, %v804
  %v806 = vsub.f32 1.0, %v805
  %v807 = vmul.f32 %v804, %v806
  %v808 = vadd.f32 %v804, %v807
  %vm809 = vweird.f32 %v804
  %v810 = vsel %vm809, %v804, %v808
  %s811 = vtos %v810
  %s812 = smul.f32 %s803, %s811
  %s813 = sadd.f32 %s777, %s812
  %vm814 = vcmp.eq.f32.partialorder %v741, %v743
  %v815 = vsel %vm814, %v34, 128
  %v816 = vand.u32 %v815, 65535
  %v817 = vshra.s32 %v815, 16
  %v818 = vcvt.s32.f32 %v816
  %v819 = vcvt.s32.f32 %v817
  %820 = vmin.xlane.f32.xlu0 %v819
  %v821 = vpop.xlane.xlu0 %820
  %vm822 = vcmp.eq.f32.partialorder %v819, %v821
  %v823 = vsel %vm822, %v818, inf
  %824 = vmin.xlane.f32.xlu0 %v823
  %v825 = vpop.xlane.xlu0 %824
  %v826 = vcvt.f32.s32 %v825
  %v827 = vcvt.f32.s32 %v821
  %v828 = vshll.u32 %v827, 16
  %v829 = vadd.s32 %v828, %v826
  %vm830 = vcmp.eq.s32.totalorder %v829, %v534
  %v831 = vsel %vm830, 1, 0
  %v832 = vcvt.s32.f32 %v831
  %v833 = vsel %vm758, %v832, 0.0
  %834 = vadd.xlane.f32.xlu0 %v833
  %v835 = vpop.xlane.xlu0 %834
  %v836 = vrot.slane %v835, 4
  %v837 = vadd.f32 %v835, %v836
  %v838 = vrot.slane %v837, 2
  %v839 = vadd.f32 %v837, %v838
  %v840 = vrot.slane %v839, 1
  %v841 = vadd.f32 %v839, %v840
  %s842 = vtos %v841
  %v843 = vrcp.pop 8.0
  %v844 = vmul.f32 8.0, %v843
  %v845 = vsub.f32 1.0, %v844
  %v846 = vmul.f32 %v843, %v845
  %v847 = vadd.f32 %v843, %v846
  %vm848 = vweird.f32 %v843
  %v849 = vsel %vm848, %v843, %v847
  %s850 = vtos %v849
  %s851 = smul.f32 %s842, %s850
  %vm852 = vcmp.eq.s32.totalorder %v534, 0
  %vm853 = vcmp.eq.s32.totalorder %v34, 8
  %vm854 = vmand %vm852, %vm853
  %v855 = vstv %s813
  %v856 = vsel %vm854, %v855, %v718
  %vm857 = vcmp.eq.s32.totalorder %v34, 9
  %vm858 = vmand %vm852, %vm857
  %v859 = vstv %s851
  %v860 = vsel %vm858, %v859, %v856
  %861 = vst [vmem:[%s8] sm:$0xff] %v860
  // Predicated region
  $region34: #{code_search_forward.1} parent=0 // pred_check
    _
  $region35: #{code_search_forward.1} parent=0 // pred_check_branch
    %863 = sbr.rel (0) target = $region37
  $region36: #{code_search_forward.1} parent=0 // pred_region
    _
  $region37: #{code_search_forward.1} parent=0 // pred_fallthru
    _
  // Predicated region
  $region38: #{code_search_forward.1} parent=0 // pred_check
    _
  $region39: #{code_search_forward.1} parent=0 // pred_check_branch
    %865 = sbr.rel (0) target = $region41
  $region40: #{code_search_forward.1} parent=0 // pred_region
    _
  $region41: #{code_search_forward.1} parent=0 // pred_fallthru
    _

</llo_original>
